<compile_context>
chip_gen: v7x
topology: tpu7x:2x2x1
jax: 0.10.0
libtpu: 0.0.40
codegen_flags: <defaults>
</compile_context>

<pallas_src>
import functools

import jax
import jax.numpy as jnp
from jax import lax
from jax.experimental import pallas as pl
from jax.experimental.pallas import tpu as pltpu


LAYER_SIZES = [(11, 16), (16, 16), (16, 12), (12, 8), (8, 1)]  # (fan_in, fan_out)
NIN = LAYER_SIZES[0][0]
HMAX = 16  # every hidden width fits in 16 rows (zero-padded)


def _round_up(x, m):
    return ((x + m - 1) // m) * m


def init_params(key, layer_sizes=LAYER_SIZES, std=0.01):
    """Matches RegressorModule._initialize_weights: W ~ N(0, 0.01), b = 0.

    Weights use the PyTorch layout (fan_out, fan_in); biases are (fan_out,).
    """
    params = []
    for fan_in, fan_out in layer_sizes:
        key, sub = jax.random.split(key)
        w = (std * jax.random.normal(sub, (fan_out, fan_in))).astype(jnp.float32)
        b = jnp.zeros((fan_out,), dtype=jnp.float32)
        params.append((w, b))
    return params


def _make_kernel(chunk, n_chunks):
    """Kernel over one (11, tb) batch slab; inner loop over lane chunks."""

    def kernel(x_ref, w1_ref, wp_ref, bb_ref, o_ref):
        # x_ref : (11, tb)        input slab, batch on lanes
        # w1_ref: (16, 11)        layer-1 weight (torch layout)
        # wp_ref: (4, 16, 16)     layers 2..5 weights, zero-padded to 16x16
        # bb_ref: (5, 16, chunk)  biases pre-broadcast along lanes
        # o_ref : (1, tb)         lane-dense output slab
        def body(c, carry):
            start = pl.multiple_of(c * chunk, chunk)
            xc = x_ref[:, pl.ds(start, chunk)].astype(jnp.float32)     # (11, chunk)
            h = jnp.dot(w1_ref[...], xc, preferred_element_type=jnp.float32)
            h = jnp.maximum(h + bb_ref[0], 0.0)                        # (16, chunk)
            h = jnp.dot(wp_ref[0], h, preferred_element_type=jnp.float32)
            h = jnp.maximum(h + bb_ref[1], 0.0)
            h = jnp.dot(wp_ref[1], h, preferred_element_type=jnp.float32)
            h = jnp.maximum(h + bb_ref[2], 0.0)
            h = jnp.dot(wp_ref[2], h, preferred_element_type=jnp.float32)
            h = jnp.maximum(h + bb_ref[3], 0.0)
            y = jnp.dot(wp_ref[3], h, preferred_element_type=jnp.float32) + bb_ref[4]
            # Only row 0 of the zero-padded final layer is real.
            o_ref[:, pl.ds(start, chunk)] = y[:1, :].astype(o_ref.dtype)
            return carry

        lax.fori_loop(0, n_chunks, body, 0, unroll=True)

    return kernel


@functools.partial(jax.jit, static_argnames=("block_b", "chunk"))
def regressor_forward(x, params, block_b=4096, chunk=512):
    """Pallas forward pass of RegressorModule. x: (B, 11) -> (B, 1)."""
    B, nin = x.shape
    assert nin == NIN, f"expected {NIN} input features, got {nin}"
    assert len(params) == len(LAYER_SIZES)

    # ---- batch tiling (batch lives on the lane axis) ----
    block_b = max(128, _round_up(block_b, 128))
    tb = min(block_b, _round_up(B, 128))
    # Keep >= 2 grid steps when the batch is big enough so the "parallel"
    # axis can shard across both v7x TensorCores.
    if B > 256 and _round_up(B, tb) // tb < 2:
        tb = _round_up(-(-B // 2), 128)
    Bp = _round_up(B, tb)
    grid = (Bp // tb,)

    # Inner lane-chunk size: keeps each chunk's 5-layer chain in registers.
    chunk = max(128, min(chunk, tb))
    while tb % chunk:
        chunk //= 2
    n_chunks = tb // chunk

    # ---- one-time layout prep (only the x transpose touches bulk data) ----
    xt = jnp.pad(x.T, ((0, 0), (0, Bp - B)))              # (11, Bp)

    w1 = params[0][0].astype(jnp.float32)                 # (16, 11)
    wp = jnp.zeros((4, HMAX, HMAX), jnp.float32)          # layers 2..5, padded
    bb = jnp.zeros((5, HMAX, chunk), jnp.float32)         # biases, lane-broadcast
    for l, (w, b) in enumerate(params):
        if l > 0:
            wp = wp.at[l - 1, : w.shape[0], : w.shape[1]].set(w.astype(jnp.float32))
        bb = bb.at[l, : b.shape[0], :].set(
            jnp.broadcast_to(b.astype(jnp.float32)[:, None], (b.shape[0], chunk)))

    # ---- specs: x/out stream over the grid; params are resident ----
    in_specs = [
        pl.BlockSpec((NIN, tb), lambda i: (0, i)),
        pl.BlockSpec(w1.shape, lambda i: (0, 0)),
        pl.BlockSpec(wp.shape, lambda i: (0, 0, 0)),
        pl.BlockSpec(bb.shape, lambda i: (0, 0, 0)),
    ]
    out_spec = pl.BlockSpec((1, tb), lambda i: (0, i))     # lane-dense output

    flops = 2 * sum(fi * fo for fi, fo in LAYER_SIZES) * Bp
    bytes_accessed = (xt.size * xt.dtype.itemsize + Bp * 4
                      + (w1.size + wp.size + bb.size) * 4)

    out = pl.pallas_call(
        _make_kernel(chunk, n_chunks),
        out_shape=jax.ShapeDtypeStruct((1, Bp), jnp.float32),
        grid=grid,
        in_specs=in_specs,
        out_specs=out_spec,
        compiler_params=pltpu.CompilerParams(
            dimension_semantics=("parallel",)),
        cost_estimate=pl.CostEstimate(
            flops=flops, transcendentals=0, bytes_accessed=bytes_accessed),
    )(xt, w1, wp, bb)

    # (1, Bp) -> (Bp, 1) is a free reshape (identical linear layout).
    return out.reshape(Bp, 1)[:B]


def regressor_ref(x, params):
    """Plain-JAX reference (same math as the PyTorch module)."""
    h = x.astype(jnp.float32)
    for i, (w, b) in enumerate(params):
        h = h @ w.T + b
        if i < len(params) - 1:
            h = jnp.maximum(h, 0.0)
    return h


if __name__ == "__main__":
    key = jax.random.PRNGKey(0)
    k_params, k_big, k_x1, k_x2, k_x3 = jax.random.split(key, 5)

    # Spec-matching init (std=0.01, zero bias) ...
    params = init_params(k_params)
    # ... plus a larger-scale param set for a numerically meaningful check.
    params_big = init_params(k_big, std=0.5)
    params_big = [(w, 0.1 * jnp.ones_like(b)) for (w, b) in params_big]

    def check(x, ps, **kw):
        y = jax.block_until_ready(regressor_forward(x, ps, **kw))
        ref = regressor_ref(x.astype(jnp.float32), ps)
        assert y.shape == (x.shape[0], 1), y.shape
        scale = float(jnp.max(jnp.abs(ref))) + 1e-30
        err = float(jnp.max(jnp.abs(y - ref)))
        assert err <= 1e-4 * scale, (err, scale)

    # Small batch consistent with forward(X): X is (batch, ninput=11).
    x_small = jax.random.normal(k_x1, (8, NIN), dtype=jnp.float32)
    check(x_small, params)
    check(x_small, params_big)

    # Ragged batch exercising batch padding and the >=2-grid rule.
    x_mid = jax.random.normal(k_x2, (300, NIN), dtype=jnp.float32)
    check(x_mid, params)
    check(x_mid, params_big)

    # Larger batch exercising grid > 1 and the inner lane-chunk loop,
    # plus an explicit smaller tile and a bf16-stored input.
    x_big = jax.random.normal(k_x3, (2048, NIN), dtype=jnp.float32)
    check(x_big, params)
    check(x_big, params_big)
    check(x_big, params_big, block_b=512)
    check(x_big.astype(jnp.bfloat16), params_big)

    print("KERNEL_OK")
</pallas_src>

<mosaic_0001>
module attributes {stable_mosaic.version = 11 : i64} {
  func.func @kernel(%arg0: i32, %arg1: memref<11x128xf32, #tpu.memory_space<vmem>>, %arg2: memref<16x11xf32, #tpu.memory_space<vmem>>, %arg3: memref<4x16x16xf32, #tpu.memory_space<vmem>>, %arg4: memref<5x16x128xf32, #tpu.memory_space<vmem>>, %arg5: memref<1x128xf32, #tpu.memory_space<vmem>>) attributes {dimension_semantics = [#tpu.dimension_semantics<parallel>], iteration_bounds = array<i64: 1>, scalar_prefetch = 0 : i64, scratch_operands = 0 : i64, tpu.core_type = #tpu.core_type<tc>, window_params = [{transform_indices = @transform_0, window_bounds = array<i64: 11, 128>}, {pipeline_mode = #tpu.pipeline_mode<synchronous>, transform_indices = @transform_1, window_bounds = array<i64: 16, 11>}, {pipeline_mode = #tpu.pipeline_mode<synchronous>, transform_indices = @transform_2, window_bounds = array<i64: 4, 16, 16>}, {pipeline_mode = #tpu.pipeline_mode<synchronous>, transform_indices = @transform_3, window_bounds = array<i64: 5, 16, 128>}, {transform_indices = @transform_4, window_bounds = array<i64: 1, 128>}]} {
    %c0_i32 = arith.constant 0 : i32
    %c128_i32 = arith.constant 128 : i32
    %0 = arith.muli %c0_i32, %c128_i32 : i32
    %1 = tpu.assume_multiple %0, 128 : i32
    %c0 = arith.constant 0 : index
    %2 = arith.index_cast %1 : i32 to index
    %3 = vector.load %arg1[%c0, %2] : memref<11x128xf32, #tpu.memory_space<vmem>>, vector<11x128xf32>
    %c0_0 = arith.constant 0 : index
    %c0_1 = arith.constant 0 : index
    %4 = vector.load %arg2[%c0_0, %c0_1] : memref<16x11xf32, #tpu.memory_space<vmem>>, vector<16x11xf32>
    %cst = arith.constant dense<0.000000e+00> : vector<16x128xf32>
    %5 = tpu.matmul %4, %3, %cst {dimension_numbers = #tpu.dot_dimension_numbers<[1], [0], [0], [1], [0, 0, 1, 1], [], []>} : vector<16x11xf32>, vector<11x128xf32>, vector<16x128xf32> -> vector<16x128xf32>
    %c0_2 = arith.constant 0 : index
    %c0_3 = arith.constant 0 : index
    %c0_4 = arith.constant 0 : index
    %6 = vector.load %arg4[%c0_2, %c0_3, %c0_4] : memref<5x16x128xf32, #tpu.memory_space<vmem>>, vector<1x16x128xf32>
    %7 = vector.shape_cast %6 : vector<1x16x128xf32> to vector<16x128xf32>
    %8 = arith.addf %5, %7 : vector<16x128xf32>
    %cst_5 = arith.constant 0.000000e+00 : f32
    %9 = vector.broadcast %cst_5 : f32 to vector<16x128xf32>
    %10 = arith.maximumf %8, %9 : vector<16x128xf32>
    %c0_6 = arith.constant 0 : index
    %c0_7 = arith.constant 0 : index
    %c0_8 = arith.constant 0 : index
    %11 = vector.load %arg3[%c0_6, %c0_7, %c0_8] : memref<4x16x16xf32, #tpu.memory_space<vmem>>, vector<1x16x16xf32>
    %12 = vector.shape_cast %11 : vector<1x16x16xf32> to vector<16x16xf32>
    %cst_9 = arith.constant dense<0.000000e+00> : vector<16x128xf32>
    %13 = tpu.matmul %12, %10, %cst_9 {dimension_numbers = #tpu.dot_dimension_numbers<[1], [0], [0], [1], [0, 0, 1, 1], [], []>} : vector<16x16xf32>, vector<16x128xf32>, vector<16x128xf32> -> vector<16x128xf32>
    %c1 = arith.constant 1 : index
    %c0_10 = arith.constant 0 : index
    %c0_11 = arith.constant 0 : index
    %14 = vector.load %arg4[%c1, %c0_10, %c0_11] : memref<5x16x128xf32, #tpu.memory_space<vmem>>, vector<1x16x128xf32>
    %15 = vector.shape_cast %14 : vector<1x16x128xf32> to vector<16x128xf32>
    %16 = arith.addf %13, %15 : vector<16x128xf32>
    %cst_12 = arith.constant 0.000000e+00 : f32
    %17 = vector.broadcast %cst_12 : f32 to vector<16x128xf32>
    %18 = arith.maximumf %16, %17 : vector<16x128xf32>
    %c1_13 = arith.constant 1 : index
    %c0_14 = arith.constant 0 : index
    %c0_15 = arith.constant 0 : index
    %19 = vector.load %arg3[%c1_13, %c0_14, %c0_15] : memref<4x16x16xf32, #tpu.memory_space<vmem>>, vector<1x16x16xf32>
    %20 = vector.shape_cast %19 : vector<1x16x16xf32> to vector<16x16xf32>
    %cst_16 = arith.constant dense<0.000000e+00> : vector<16x128xf32>
    %21 = tpu.matmul %20, %18, %cst_16 {dimension_numbers = #tpu.dot_dimension_numbers<[1], [0], [0], [1], [0, 0, 1, 1], [], []>} : vector<16x16xf32>, vector<16x128xf32>, vector<16x128xf32> -> vector<16x128xf32>
    %c2 = arith.constant 2 : index
    %c0_17 = arith.constant 0 : index
    %c0_18 = arith.constant 0 : index
    %22 = vector.load %arg4[%c2, %c0_17, %c0_18] : memref<5x16x128xf32, #tpu.memory_space<vmem>>, vector<1x16x128xf32>
    %23 = vector.shape_cast %22 : vector<1x16x128xf32> to vector<16x128xf32>
    %24 = arith.addf %21, %23 : vector<16x128xf32>
    %cst_19 = arith.constant 0.000000e+00 : f32
    %25 = vector.broadcast %cst_19 : f32 to vector<16x128xf32>
    %26 = arith.maximumf %24, %25 : vector<16x128xf32>
    %c2_20 = arith.constant 2 : index
    %c0_21 = arith.constant 0 : index
    %c0_22 = arith.constant 0 : index
    %27 = vector.load %arg3[%c2_20, %c0_21, %c0_22] : memref<4x16x16xf32, #tpu.memory_space<vmem>>, vector<1x16x16xf32>
    %28 = vector.shape_cast %27 : vector<1x16x16xf32> to vector<16x16xf32>
    %cst_23 = arith.constant dense<0.000000e+00> : vector<16x128xf32>
    %29 = tpu.matmul %28, %26, %cst_23 {dimension_numbers = #tpu.dot_dimension_numbers<[1], [0], [0], [1], [0, 0, 1, 1], [], []>} : vector<16x16xf32>, vector<16x128xf32>, vector<16x128xf32> -> vector<16x128xf32>
    %c3 = arith.constant 3 : index
    %c0_24 = arith.constant 0 : index
    %c0_25 = arith.constant 0 : index
    %30 = vector.load %arg4[%c3, %c0_24, %c0_25] : memref<5x16x128xf32, #tpu.memory_space<vmem>>, vector<1x16x128xf32>
    %31 = vector.shape_cast %30 : vector<1x16x128xf32> to vector<16x128xf32>
    %32 = arith.addf %29, %31 : vector<16x128xf32>
    %cst_26 = arith.constant 0.000000e+00 : f32
    %33 = vector.broadcast %cst_26 : f32 to vector<16x128xf32>
    %34 = arith.maximumf %32, %33 : vector<16x128xf32>
    %c3_27 = arith.constant 3 : index
    %c0_28 = arith.constant 0 : index
    %c0_29 = arith.constant 0 : index
    %35 = vector.load %arg3[%c3_27, %c0_28, %c0_29] : memref<4x16x16xf32, #tpu.memory_space<vmem>>, vector<1x16x16xf32>
    %36 = vector.shape_cast %35 : vector<1x16x16xf32> to vector<16x16xf32>
    %cst_30 = arith.constant dense<0.000000e+00> : vector<16x128xf32>
    %37 = tpu.matmul %36, %34, %cst_30 {dimension_numbers = #tpu.dot_dimension_numbers<[1], [0], [0], [1], [0, 0, 1, 1], [], []>} : vector<16x16xf32>, vector<16x128xf32>, vector<16x128xf32> -> vector<16x128xf32>
    %c4 = arith.constant 4 : index
    %c0_31 = arith.constant 0 : index
    %c0_32 = arith.constant 0 : index
    %38 = vector.load %arg4[%c4, %c0_31, %c0_32] : memref<5x16x128xf32, #tpu.memory_space<vmem>>, vector<1x16x128xf32>
    %39 = vector.shape_cast %38 : vector<1x16x128xf32> to vector<16x128xf32>
    %40 = arith.addf %37, %39 : vector<16x128xf32>
    %41 = vector.extract_strided_slice %40 {offsets = [0, 0], sizes = [1, 128], strides = [1, 1]} : vector<16x128xf32> to vector<1x128xf32>
    %c0_33 = arith.constant 0 : index
    %42 = arith.index_cast %1 : i32 to index
    %43 = vector.load %arg5[%c0_33, %42] : memref<1x128xf32, #tpu.memory_space<vmem>>, vector<1x128xf32>
    tpu.vector_store %arg5[%c0_33, %42], %41 {strides = array<i32>} : memref<1x128xf32, #tpu.memory_space<vmem>>, vector<1x128xf32>,
    %c1_i32 = arith.constant 1 : i32
    return
  }
  func.func @transform_0(%arg0: i32) -> (i32, i32) {
    %c0_i32 = arith.constant 0 : i32
    %c0_i32_0 = arith.constant 0 : i32
    return %c0_i32, %arg0 : i32, i32
  }
  func.func @transform_1(%arg0: i32) -> (i32, i32) {
    %c0_i32 = arith.constant 0 : i32
    %c0_i32_0 = arith.constant 0 : i32
    %c0_i32_1 = arith.constant 0 : i32
    return %c0_i32, %c0_i32_0 : i32, i32
  }
  func.func @transform_2(%arg0: i32) -> (i32, i32, i32) {
    %c0_i32 = arith.constant 0 : i32
    %c0_i32_0 = arith.constant 0 : i32
    %c0_i32_1 = arith.constant 0 : i32
    %c0_i32_2 = arith.constant 0 : i32
    return %c0_i32, %c0_i32_0, %c0_i32_1 : i32, i32, i32
  }
  func.func @transform_3(%arg0: i32) -> (i32, i32, i32) {
    %c0_i32 = arith.constant 0 : i32
    %c0_i32_0 = arith.constant 0 : i32
    %c0_i32_1 = arith.constant 0 : i32
    %c0_i32_2 = arith.constant 0 : i32
    return %c0_i32, %c0_i32_0, %c0_i32_1 : i32, i32, i32
  }
  func.func @transform_4(%arg0: i32) -> (i32, i32) {
    %c0_i32 = arith.constant 0 : i32
    %c0_i32_0 = arith.constant 0 : i32
    return %c0_i32, %arg0 : i32, i32
  }
}

</mosaic_0001>

<llo_original>
// kernel: regressor_forward.1
$region0: #{regressor_forward.1}
  #allocation0 [shape = 'u32[]', space=smem, size = 0x4, offset = 0x4, fixed_abs, tag = 'smem constant byte address 0x4 - core index']
  #allocation1 [shape = 'u32[144,128]{1,0:T(1,128)}', space=vmem, size = 0x12000, scoped, tag = 'internal scratch']
  %s0 = inlined_call_operand.vmem [shape: f32[11,128], index: 0, kind: input, shape index: {}]
  %s1 = inlined_call_operand.vmem [shape: f32[16,11], index: 1, kind: input, shape index: {}]
  %s2 = inlined_call_operand.vmem [shape: f32[4,16,16], index: 2, kind: input, shape index: {}]
  %s3 = inlined_call_operand.vmem [shape: f32[5,16,128], index: 3, kind: input, shape index: {}]
  %s4 = inlined_call_operand.vmem [shape: f32[1,128], index: 4, kind: output, shape index: {}]
  %s5 = sld [smem:[#allocation0]]
  $region26: #{regressor_forward.1} parent=0
    _
  %s7 = ssub.s32 1, %s5
  %s8 = scalar_select 0, %s7, %s5
  // Predicated region
  $region2: #{regressor_forward.1} parent=0 // pred_check
    _
  $region3: #{regressor_forward.1} parent=0 // pred_check_branch
    %10 = sbr.rel (0) target = $region5
  $region4: #{regressor_forward.1} parent=0 // pred_region
    _
  $region5: #{regressor_forward.1} parent=0 // pred_fallthru
    _
  // Predicated region
  $region6: #{regressor_forward.1} parent=0 // pred_check
    _
  $region7: #{regressor_forward.1} parent=0 // pred_check_branch
    %12 = sbr.rel (0) target = $region9
  $region8: #{regressor_forward.1} parent=0 // pred_region
    _
  $region9: #{regressor_forward.1} parent=0 // pred_fallthru
    _
  // Predicated region
  $region10: #{regressor_forward.1} parent=0 // pred_check
    _
  $region11: #{regressor_forward.1} parent=0 // pred_check_branch
    %14 = sbr.rel (0) target = $region13
  $region12: #{regressor_forward.1} parent=0 // pred_region
    _
  $region13: #{regressor_forward.1} parent=0 // pred_fallthru
    _
  // Predicated region
  $region14: #{regressor_forward.1} parent=0 // pred_check
    _
  $region15: #{regressor_forward.1} parent=0 // pred_check_branch
    %16 = sbr.rel (0) target = $region17
  $region16: #{regressor_forward.1} parent=0 // pred_region
    _
  $region17: #{regressor_forward.1} parent=0 // pred_fallthru
    _
  %v17 = vld [vmem:[%s0] sm:$0xff]
  %v18 = vld [vmem:[%s0 + $0x8] sm:$0x7]
  %v19 = vld [vmem:[%s1] sm:$0xff]
  %v20 = vld [vmem:[%s1 + $0x8] sm:$0xff]
  %v21 = vld [vmem:[%s3] sm:$0xff]
  %v22 = vld [vmem:[%s3 + $0x8] sm:$0xff]
  %vm23 = vcmask 89088
  %v25 = vsel %vm23, %v19, 0
  %v28 = vsel %vm23, %v20, 0
  %vm30 = vcmask 1042432
  %v32 = vsel %vm30, %v18, 0
  %34 = vmatprep.subr.mxu0 0.0
  %35 = vmatpush1.msra.mxu0 %v17
  %36 = vmatprep.subr.mxu0 0.0
  %37 = vmatpush1.msra.mxu0 %v32
  %38 = vmatprep.subr.mxu0 0.0
  %39 = vmatpush1.msra.mxu0 0.0
  %40 = vmatprep.subr.mxu0 0.0
  %41 = vmatpush1.msra.mxu0 0.0
  %42 = vmatprep.subr.mxu0 0.0
  %43 = vmatpush1.msra.mxu0 0.0
  %44 = vmatprep.subr.mxu0 0.0
  %45 = vmatpush1.msra.mxu0 0.0
  %46 = vmatprep.subr.mxu0 0.0
  %47 = vmatpush1.msra.mxu0 0.0
  %48 = vmatprep.subr.mxu0 0.0
  %49 = vmatpush1.msra.mxu0 0.0
  %50 = vmatprep.subr.mxu0 0.0
  %51 = vmatpush1.msra.mxu0 0.0
  %52 = vmatprep.subr.mxu0 0.0
  %53 = vmatpush1.msra.mxu0 0.0
  %54 = vmatprep.subr.mxu0 0.0
  %55 = vmatpush1.msra.mxu0 0.0
  %56 = vmatprep.subr.mxu0 0.0
  %57 = vmatpush1.msra.mxu0 0.0
  %58 = vmatprep.subr.mxu0 0.0
  %59 = vmatpush1.msra.mxu0 0.0
  %60 = vmatprep.subr.mxu0 0.0
  %61 = vmatpush1.msra.mxu0 0.0
  %62 = vmatprep.subr.mxu0 0.0
  %63 = vmatpush1.msra.mxu0 0.0
  %64 = vmatprep.subr.mxu0 0.0
  %65 = vmatpush1.msra.mxu0 0.0
  %66 = vmatprep.subr.mxu0 0.0
  %67 = vmatpush1.msra.mxu0 0.0
  %68 = vmatprep.subr.mxu0 0.0
  %69 = vmatpush1.msra.mxu0 0.0
  %70 = vmatprep.subr.mxu0 0.0
  %71 = vmatpush1.msra.mxu0 0.0
  %72 = vmatprep.subr.mxu0 0.0
  %73 = vmatpush1.msra.mxu0 0.0
  %74 = vmatprep.subr.mxu0 0.0
  %75 = vmatpush1.msra.mxu0 0.0
  %76 = vmatprep.subr.mxu0 0.0
  %77 = vmatpush1.msra.mxu0 0.0
  %78 = vmatprep.subr.mxu0 0.0
  %79 = vmatpush1.msra.mxu0 0.0
  %80 = vmatprep.subr.mxu0 0.0
  %81 = vmatpush1.msra.mxu0 0.0
  %82 = vmatprep.subr.mxu0 0.0
  %83 = vmatpush1.msra.mxu0 0.0
  %84 = vmatprep.subr.mxu0 0.0
  %85 = vmatpush1.msra.mxu0 0.0
  %86 = vmatprep.subr.mxu0 0.0
  %87 = vmatpush1.msra.mxu0 0.0
  %88 = vmatprep.subr.mxu0 0.0
  %89 = vmatpush1.msra.mxu0 0.0
  %90 = vmatprep.subr.mxu0 0.0
  %91 = vmatpush1.msra.mxu0 0.0
  %92 = vmatprep.subr.mxu0 0.0
  %93 = vmatpush1.msra.mxu0 0.0
  %94 = vmatprep.subr.mxu0 0.0
  %95 = vmatpush1.msra.mxu0 0.0
  %96 = vmatprep.subr.mxu0 0.0
  %97 = vmatpush1.msra.mxu0 0.0
  %98 = vmatprep.mubr.f32.mxu0 0.0
  %99 = vmatmul.mubr.f32.gmra.mrb[0].mxu0 %v25
  %v100 = vpop.f32.mrb[0].mxu0
  %v101 = vadd.f32 %v21, %v100
  %v102 = vpop.f32.mrb[0].mxu0
  %103 = vmatprep.mubr.f32.mxu0 0.0
  %104 = vmatmul.mubr.f32.gmra.mrb[0].mxu0 %v28
  %v105 = vpop.f32.mrb[0].mxu0
  %v106 = vadd.f32 %v22, %v105
  %v107 = vpop.f32.mrb[0].mxu0
  %108 = vdwg.mxu0
  %v109 = vmax.f32 %v101, 0.0
  %v110 = vmax.f32 %v106, 0.0
  %v111 = vld [vmem:[%s2] sm:$0xff]
  %v112 = vld [vmem:[%s2 + $0x8] sm:$0xff]
  %s113 = scalar_lea.vmem %s3, 16
  %v114 = vld [vmem:[%s113] sm:$0xff]
  %v115 = vld [vmem:[%s113 + $0x8] sm:$0xff]
  %vm116 = vcmask 130048
  %v118 = vsel %vm116, %v111, 0
  %v121 = vsel %vm116, %v112, 0
  %123 = vmatprep.subr.mxu0 0.0
  %124 = vmatpush1.msra.mxu0 %v109
  %125 = vmatprep.subr.mxu0 0.0
  %126 = vmatpush1.msra.mxu0 %v110
  %127 = vmatprep.subr.mxu0 0.0
  %128 = vmatpush1.msra.mxu0 0.0
  %129 = vmatprep.subr.mxu0 0.0
  %130 = vmatpush1.msra.mxu0 0.0
  %131 = vmatprep.subr.mxu0 0.0
  %132 = vmatpush1.msra.mxu0 0.0
  %133 = vmatprep.subr.mxu0 0.0
  %134 = vmatpush1.msra.mxu0 0.0
  %135 = vmatprep.subr.mxu0 0.0
  %136 = vmatpush1.msra.mxu0 0.0
  %137 = vmatprep.subr.mxu0 0.0
  %138 = vmatpush1.msra.mxu0 0.0
  %139 = vmatprep.subr.mxu0 0.0
  %140 = vmatpush1.msra.mxu0 0.0
  %141 = vmatprep.subr.mxu0 0.0
  %142 = vmatpush1.msra.mxu0 0.0
  %143 = vmatprep.subr.mxu0 0.0
  %144 = vmatpush1.msra.mxu0 0.0
  %145 = vmatprep.subr.mxu0 0.0
  %146 = vmatpush1.msra.mxu0 0.0
  %147 = vmatprep.subr.mxu0 0.0
  %148 = vmatpush1.msra.mxu0 0.0
  %149 = vmatprep.subr.mxu0 0.0
  %150 = vmatpush1.msra.mxu0 0.0
  %151 = vmatprep.subr.mxu0 0.0
  %152 = vmatpush1.msra.mxu0 0.0
  %153 = vmatprep.subr.mxu0 0.0
  %154 = vmatpush1.msra.mxu0 0.0
  %155 = vmatprep.subr.mxu0 0.0
  %156 = vmatpush1.msra.mxu0 0.0
  %157 = vmatprep.subr.mxu0 0.0
  %158 = vmatpush1.msra.mxu0 0.0
  %159 = vmatprep.subr.mxu0 0.0
  %160 = vmatpush1.msra.mxu0 0.0
  %161 = vmatprep.subr.mxu0 0.0
  %162 = vmatpush1.msra.mxu0 0.0
  %163 = vmatprep.subr.mxu0 0.0
  %164 = vmatpush1.msra.mxu0 0.0
  %165 = vmatprep.subr.mxu0 0.0
  %166 = vmatpush1.msra.mxu0 0.0
  %167 = vmatprep.subr.mxu0 0.0
  %168 = vmatpush1.msra.mxu0 0.0
  %169 = vmatprep.subr.mxu0 0.0
  %170 = vmatpush1.msra.mxu0 0.0
  %171 = vmatprep.subr.mxu0 0.0
  %172 = vmatpush1.msra.mxu0 0.0
  %173 = vmatprep.subr.mxu0 0.0
  %174 = vmatpush1.msra.mxu0 0.0
  %175 = vmatprep.subr.mxu0 0.0
  %176 = vmatpush1.msra.mxu0 0.0
  %177 = vmatprep.subr.mxu0 0.0
  %178 = vmatpush1.msra.mxu0 0.0
  %179 = vmatprep.subr.mxu0 0.0
  %180 = vmatpush1.msra.mxu0 0.0
  %181 = vmatprep.subr.mxu0 0.0
  %182 = vmatpush1.msra.mxu0 0.0
  %183 = vmatprep.subr.mxu0 0.0
  %184 = vmatpush1.msra.mxu0 0.0
  %185 = vmatprep.subr.mxu0 0.0
  %186 = vmatpush1.msra.mxu0 0.0
  %187 = vmatprep.mubr.f32.mxu0 0.0
  %188 = vmatmul.mubr.f32.gmra.mrb[0].mxu0 %v118
  %v189 = vpop.f32.mrb[0].mxu0
  %v190 = vadd.f32 %v114, %v189
  %v191 = vpop.f32.mrb[0].mxu0
  %192 = vmatprep.mubr.f32.mxu0 0.0
  %193 = vmatmul.mubr.f32.gmra.mrb[0].mxu0 %v121
  %v194 = vpop.f32.mrb[0].mxu0
  %v195 = vadd.f32 %v115, %v194
  %v196 = vpop.f32.mrb[0].mxu0
  %197 = vdwg.mxu0
  %v198 = vmax.f32 %v190, 0.0
  %v199 = vmax.f32 %v195, 0.0
  %s200 = scalar_lea.vmem %s2, 16
  %v201 = vld [vmem:[%s200] sm:$0xff]
  %v202 = vld [vmem:[%s200 + $0x8] sm:$0xff]
  %s203 = scalar_lea.vmem %s3, 32
  %v204 = vld [vmem:[%s203] sm:$0xff]
  %v205 = vld [vmem:[%s203 + $0x8] sm:$0xff]
  %v207 = vsel %vm116, %v201, 0
  %v210 = vsel %vm116, %v202, 0
  %212 = vmatprep.subr.mxu0 0.0
  %213 = vmatpush1.msra.mxu0 %v198
  %214 = vmatprep.subr.mxu0 0.0
  %215 = vmatpush1.msra.mxu0 %v199
  %216 = vmatprep.subr.mxu0 0.0
  %217 = vmatpush1.msra.mxu0 0.0
  %218 = vmatprep.subr.mxu0 0.0
  %219 = vmatpush1.msra.mxu0 0.0
  %220 = vmatprep.subr.mxu0 0.0
  %221 = vmatpush1.msra.mxu0 0.0
  %222 = vmatprep.subr.mxu0 0.0
  %223 = vmatpush1.msra.mxu0 0.0
  %224 = vmatprep.subr.mxu0 0.0
  %225 = vmatpush1.msra.mxu0 0.0
  %226 = vmatprep.subr.mxu0 0.0
  %227 = vmatpush1.msra.mxu0 0.0
  %228 = vmatprep.subr.mxu0 0.0
  %229 = vmatpush1.msra.mxu0 0.0
  %230 = vmatprep.subr.mxu0 0.0
  %231 = vmatpush1.msra.mxu0 0.0
  %232 = vmatprep.subr.mxu0 0.0
  %233 = vmatpush1.msra.mxu0 0.0
  %234 = vmatprep.subr.mxu0 0.0
  %235 = vmatpush1.msra.mxu0 0.0
  %236 = vmatprep.subr.mxu0 0.0
  %237 = vmatpush1.msra.mxu0 0.0
  %238 = vmatprep.subr.mxu0 0.0
  %239 = vmatpush1.msra.mxu0 0.0
  %240 = vmatprep.subr.mxu0 0.0
  %241 = vmatpush1.msra.mxu0 0.0
  %242 = vmatprep.subr.mxu0 0.0
  %243 = vmatpush1.msra.mxu0 0.0
  %244 = vmatprep.subr.mxu0 0.0
  %245 = vmatpush1.msra.mxu0 0.0
  %246 = vmatprep.subr.mxu0 0.0
  %247 = vmatpush1.msra.mxu0 0.0
  %248 = vmatprep.subr.mxu0 0.0
  %249 = vmatpush1.msra.mxu0 0.0
  %250 = vmatprep.subr.mxu0 0.0
  %251 = vmatpush1.msra.mxu0 0.0
  %252 = vmatprep.subr.mxu0 0.0
  %253 = vmatpush1.msra.mxu0 0.0
  %254 = vmatprep.subr.mxu0 0.0
  %255 = vmatpush1.msra.mxu0 0.0
  %256 = vmatprep.subr.mxu0 0.0
  %257 = vmatpush1.msra.mxu0 0.0
  %258 = vmatprep.subr.mxu0 0.0
  %259 = vmatpush1.msra.mxu0 0.0
  %260 = vmatprep.subr.mxu0 0.0
  %261 = vmatpush1.msra.mxu0 0.0
  %262 = vmatprep.subr.mxu0 0.0
  %263 = vmatpush1.msra.mxu0 0.0
  %264 = vmatprep.subr.mxu0 0.0
  %265 = vmatpush1.msra.mxu0 0.0
  %266 = vmatprep.subr.mxu0 0.0
  %267 = vmatpush1.msra.mxu0 0.0
  %268 = vmatprep.subr.mxu0 0.0
  %269 = vmatpush1.msra.mxu0 0.0
  %270 = vmatprep.subr.mxu0 0.0
  %271 = vmatpush1.msra.mxu0 0.0
  %272 = vmatprep.subr.mxu0 0.0
  %273 = vmatpush1.msra.mxu0 0.0
  %274 = vmatprep.subr.mxu0 0.0
  %275 = vmatpush1.msra.mxu0 0.0
  %276 = vmatprep.mubr.f32.mxu0 0.0
  %277 = vmatmul.mubr.f32.gmra.mrb[0].mxu0 %v207
  %v278 = vpop.f32.mrb[0].mxu0
  %v279 = vadd.f32 %v204, %v278
  %v280 = vpop.f32.mrb[0].mxu0
  %281 = vmatprep.mubr.f32.mxu0 0.0
  %282 = vmatmul.mubr.f32.gmra.mrb[0].mxu0 %v210
  %v283 = vpop.f32.mrb[0].mxu0
  %v284 = vadd.f32 %v205, %v283
  %v285 = vpop.f32.mrb[0].mxu0
  %286 = vdwg.mxu0
  %v287 = vmax.f32 %v279, 0.0
  %v288 = vmax.f32 %v284, 0.0
  %s289 = scalar_lea.vmem %s2, 32
  %v290 = vld [vmem:[%s289] sm:$0xff]
  %v291 = vld [vmem:[%s289 + $0x8] sm:$0xff]
  %s292 = scalar_lea.vmem %s3, 48
  %v293 = vld [vmem:[%s292] sm:$0xff]
  %v294 = vld [vmem:[%s292 + $0x8] sm:$0xff]
  %v296 = vsel %vm116, %v290, 0
  %v299 = vsel %vm116, %v291, 0
  %301 = vmatprep.subr.mxu0 0.0
  %302 = vmatpush1.msra.mxu0 %v287
  %303 = vmatprep.subr.mxu0 0.0
  %304 = vmatpush1.msra.mxu0 %v288
  %305 = vmatprep.subr.mxu0 0.0
  %306 = vmatpush1.msra.mxu0 0.0
  %307 = vmatprep.subr.mxu0 0.0
  %308 = vmatpush1.msra.mxu0 0.0
  %309 = vmatprep.subr.mxu0 0.0
  %310 = vmatpush1.msra.mxu0 0.0
  %311 = vmatprep.subr.mxu0 0.0
  %312 = vmatpush1.msra.mxu0 0.0
  %313 = vmatprep.subr.mxu0 0.0
  %314 = vmatpush1.msra.mxu0 0.0
  %315 = vmatprep.subr.mxu0 0.0
  %316 = vmatpush1.msra.mxu0 0.0
  %317 = vmatprep.subr.mxu0 0.0
  %318 = vmatpush1.msra.mxu0 0.0
  %319 = vmatprep.subr.mxu0 0.0
  %320 = vmatpush1.msra.mxu0 0.0
  %321 = vmatprep.subr.mxu0 0.0
  %322 = vmatpush1.msra.mxu0 0.0
  %323 = vmatprep.subr.mxu0 0.0
  %324 = vmatpush1.msra.mxu0 0.0
  %325 = vmatprep.subr.mxu0 0.0
  %326 = vmatpush1.msra.mxu0 0.0
  %327 = vmatprep.subr.mxu0 0.0
  %328 = vmatpush1.msra.mxu0 0.0
  %329 = vmatprep.subr.mxu0 0.0
  %330 = vmatpush1.msra.mxu0 0.0
  %331 = vmatprep.subr.mxu0 0.0
  %332 = vmatpush1.msra.mxu0 0.0
  %333 = vmatprep.subr.mxu0 0.0
  %334 = vmatpush1.msra.mxu0 0.0
  %335 = vmatprep.subr.mxu0 0.0
  %336 = vmatpush1.msra.mxu0 0.0
  %337 = vmatprep.subr.mxu0 0.0
  %338 = vmatpush1.msra.mxu0 0.0
  %339 = vmatprep.subr.mxu0 0.0
  %340 = vmatpush1.msra.mxu0 0.0
  %341 = vmatprep.subr.mxu0 0.0
  %342 = vmatpush1.msra.mxu0 0.0
  %343 = vmatprep.subr.mxu0 0.0
  %344 = vmatpush1.msra.mxu0 0.0
  %345 = vmatprep.subr.mxu0 0.0
  %346 = vmatpush1.msra.mxu0 0.0
  %347 = vmatprep.subr.mxu0 0.0
  %348 = vmatpush1.msra.mxu0 0.0
  %349 = vmatprep.subr.mxu0 0.0
  %350 = vmatpush1.msra.mxu0 0.0
  %351 = vmatprep.subr.mxu0 0.0
  %352 = vmatpush1.msra.mxu0 0.0
  %353 = vmatprep.subr.mxu0 0.0
  %354 = vmatpush1.msra.mxu0 0.0
  %355 = vmatprep.subr.mxu0 0.0
  %356 = vmatpush1.msra.mxu0 0.0
  %357 = vmatprep.subr.mxu0 0.0
  %358 = vmatpush1.msra.mxu0 0.0
  %359 = vmatprep.subr.mxu0 0.0
  %360 = vmatpush1.msra.mxu0 0.0
  %361 = vmatprep.subr.mxu0 0.0
  %362 = vmatpush1.msra.mxu0 0.0
  %363 = vmatprep.subr.mxu0 0.0
  %364 = vmatpush1.msra.mxu0 0.0
  %365 = vmatprep.mubr.f32.mxu0 0.0
  %366 = vmatmul.mubr.f32.gmra.mrb[0].mxu0 %v296
  %v367 = vpop.f32.mrb[0].mxu0
  %v368 = vadd.f32 %v293, %v367
  %v369 = vpop.f32.mrb[0].mxu0
  %370 = vmatprep.mubr.f32.mxu0 0.0
  %371 = vmatmul.mubr.f32.gmra.mrb[0].mxu0 %v299
  %v372 = vpop.f32.mrb[0].mxu0
  %v373 = vadd.f32 %v294, %v372
  %v374 = vpop.f32.mrb[0].mxu0
  %375 = vdwg.mxu0
  %v376 = vmax.f32 %v368, 0.0
  %v377 = vmax.f32 %v373, 0.0
  %s378 = scalar_lea.vmem %s2, 48
  %v379 = vld [vmem:[%s378] sm:$0xff]
  %v380 = vld [vmem:[%s378 + $0x8] sm:$0xff]
  %s381 = scalar_lea.vmem %s3, 64
  %v382 = vld [vmem:[%s381] sm:$0xff]
  %v384 = vsel %vm116, %v379, 0
  %v387 = vsel %vm116, %v380, 0
  %389 = vmatprep.subr.mxu0 0.0
  %390 = vmatpush1.msra.mxu0 %v376
  %391 = vmatprep.subr.mxu0 0.0
  %392 = vmatpush1.msra.mxu0 %v377
  %393 = vmatprep.subr.mxu0 0.0
  %394 = vmatpush1.msra.mxu0 0.0
  %395 = vmatprep.subr.mxu0 0.0
  %396 = vmatpush1.msra.mxu0 0.0
  %397 = vmatprep.subr.mxu0 0.0
  %398 = vmatpush1.msra.mxu0 0.0
  %399 = vmatprep.subr.mxu0 0.0
  %400 = vmatpush1.msra.mxu0 0.0
  %401 = vmatprep.subr.mxu0 0.0
  %402 = vmatpush1.msra.mxu0 0.0
  %403 = vmatprep.subr.mxu0 0.0
  %404 = vmatpush1.msra.mxu0 0.0
  %405 = vmatprep.subr.mxu0 0.0
  %406 = vmatpush1.msra.mxu0 0.0
  %407 = vmatprep.subr.mxu0 0.0
  %408 = vmatpush1.msra.mxu0 0.0
  %409 = vmatprep.subr.mxu0 0.0
  %410 = vmatpush1.msra.mxu0 0.0
  %411 = vmatprep.subr.mxu0 0.0
  %412 = vmatpush1.msra.mxu0 0.0
  %413 = vmatprep.subr.mxu0 0.0
  %414 = vmatpush1.msra.mxu0 0.0
  %415 = vmatprep.subr.mxu0 0.0
  %416 = vmatpush1.msra.mxu0 0.0
  %417 = vmatprep.subr.mxu0 0.0
  %418 = vmatpush1.msra.mxu0 0.0
  %419 = vmatprep.subr.mxu0 0.0
  %420 = vmatpush1.msra.mxu0 0.0
  %421 = vmatprep.subr.mxu0 0.0
  %422 = vmatpush1.msra.mxu0 0.0
  %423 = vmatprep.subr.mxu0 0.0
  %424 = vmatpush1.msra.mxu0 0.0
  %425 = vmatprep.subr.mxu0 0.0
  %426 = vmatpush1.msra.mxu0 0.0
  %427 = vmatprep.subr.mxu0 0.0
  %428 = vmatpush1.msra.mxu0 0.0
  %429 = vmatprep.subr.mxu0 0.0
  %430 = vmatpush1.msra.mxu0 0.0
  %431 = vmatprep.subr.mxu0 0.0
  %432 = vmatpush1.msra.mxu0 0.0
  %433 = vmatprep.subr.mxu0 0.0
  %434 = vmatpush1.msra.mxu0 0.0
  %435 = vmatprep.subr.mxu0 0.0
  %436 = vmatpush1.msra.mxu0 0.0
  %437 = vmatprep.subr.mxu0 0.0
  %438 = vmatpush1.msra.mxu0 0.0
  %439 = vmatprep.subr.mxu0 0.0
  %440 = vmatpush1.msra.mxu0 0.0
  %441 = vmatprep.subr.mxu0 0.0
  %442 = vmatpush1.msra.mxu0 0.0
  %443 = vmatprep.subr.mxu0 0.0
  %444 = vmatpush1.msra.mxu0 0.0
  %445 = vmatprep.subr.mxu0 0.0
  %446 = vmatpush1.msra.mxu0 0.0
  %447 = vmatprep.subr.mxu0 0.0
  %448 = vmatpush1.msra.mxu0 0.0
  %449 = vmatprep.subr.mxu0 0.0
  %450 = vmatpush1.msra.mxu0 0.0
  %451 = vmatprep.subr.mxu0 0.0
  %452 = vmatpush1.msra.mxu0 0.0
  %453 = vmatprep.mubr.f32.mxu0 0.0
  %454 = vmatmul.mubr.f32.gmra.mrb[0].mxu0 %v384
  %v455 = vpop.f32.mrb[0].mxu0
  %v456 = vadd.f32 %v382, %v455
  %v457 = vpop.f32.mrb[0].mxu0
  %458 = vmatprep.mubr.f32.mxu0 0.0
  %459 = vmatmul.mubr.f32.gmra.mrb[0].mxu0 %v387
  %v460 = vpop.f32.mrb[0].mxu0
  %v461 = vpop.f32.mrb[0].mxu0
  %462 = vdwg.mxu0
  %463 = vst [vmem:[%s4] sm:$0x1] %v456
  // Predicated region
  $region18: #{regressor_forward.1} parent=0 // pred_check
    _
  $region19: #{regressor_forward.1} parent=0 // pred_check_branch
    %465 = sbr.rel (0) target = $region21
  $region20: #{regressor_forward.1} parent=0 // pred_region
    _
  $region21: #{regressor_forward.1} parent=0 // pred_fallthru
    _
  // Predicated region
  $region22: #{regressor_forward.1} parent=0 // pred_check
    _
  $region23: #{regressor_forward.1} parent=0 // pred_check_branch
    %467 = sbr.rel (0) target = $region25
  $region24: #{regressor_forward.1} parent=0 // pred_region
    _
  $region25: #{regressor_forward.1} parent=0 // pred_fallthru
    _

</llo_original>
